<compile_context>
chip_gen: v6e
topology: v6e:2x2x1
jax: 0.10.0
libtpu: 0.0.40
codegen_flags: <defaults>
</compile_context>

<pallas_src>
import functools

import jax
import jax.numpy as jnp
from jax import lax
from jax.experimental import pallas as pl
from jax.experimental.pallas import tpu as pltpu

_LANE = 128


def _round_up(x, m):
    return ((x + m - 1) // m) * m


def _cdiv(a, b):
    return -(-a // b)


# ----------------------------------------------------------------------------
# chip detection: megacore split + VMEM cap are generation dependent
# ----------------------------------------------------------------------------
def _chip_config():
    kind = ""
    try:
        kind = jax.devices()[0].device_kind.lower()
    except Exception:
        pass
    is_v7 = "v7" in kind
    ncores = 2 if is_v7 else 1                     # only v7x has 2 TCs / chip
    # Stay well below physical VMEM: 64 MiB/TC on v7x, 128 MiB on v5e/v6e.
    vmem_cap = (48 if is_v7 else 96) * (1 << 20)
    return ncores, vmem_cap, is_v7


# ----------------------------------------------------------------------------
# tile sizing (includes the f32 accumulator / temporaries in the VMEM budget)
# ----------------------------------------------------------------------------
def _est_vmem_bytes(tile_hw, tile_k, cout_pad, cout, ncores, store_y):
    b = 2 * tile_hw * tile_k * 2            # bf16 x tiles, double buffered
    b += 2 * tile_k * cout_pad * 2          # bf16 weight tiles
    b += 8 * ncores * cout_pad * 4          # sum/ssq blocks (+ pipelining slack)
    b += 6 * cout_pad * 4                   # gamma/beta + scale/shift scratch
    b += tile_hw * cout_pad * 4             # f32 GEMM result / accumulator
    b += 2 * tile_hw * cout_pad * 4         # f32 temporaries (y*y, BN, transpose)
    b += 2 * cout * tile_hw * 4             # f32 output tile, double buffered
    if store_y:
        b += 2 * tile_hw * cout_pad * 2     # bf16 conv intermediate tiles
    return b


def _pick_tile_k(K, cout_pad):
    # Keep the weight tile to ~2 MiB so x/y double buffering stays deep
    # (matters most on v7x's 64 MiB VMEM).
    if K * cout_pad * 2 <= 4 * (1 << 20) and K <= 2048:
        return K
    tk = max(128, ((2 * (1 << 20)) // (cout_pad * 2)) // 128 * 128)
    tk = min(tk, 1024, _round_up(K, 128))
    return tk


def _pick_tile_hw(HW, tile_k, cout_pad, cout, ncores, vmem_cap, store_y):
    # Both kernels are HBM-bound at shortcut shapes: go as wide as the VMEM
    # budget allows to amortize the ~0.35us per-grid-step overhead.
    target = 2048 if cout_pad <= 512 else (1024 if cout_pad <= 1024 else 512)
    t = max(8, min(_round_up(target, 8), _round_up(HW, 8)))
    budget = (vmem_cap * 3) // 4
    while t > 8 and _est_vmem_bytes(t, tile_k, cout_pad, cout, ncores, store_y) > budget:
        t = max(8, _round_up(t // 2, 8))
    return t


# ----------------------------------------------------------------------------
# Pallas kernels
# ----------------------------------------------------------------------------
def _derive_scale_shift(inv_m, eps, sum_ref, ssq_ref, g_ref, b_ref,
                        scale_ref, shift_ref):
    """Reduce per-core partial stats and derive the fused BN scale/shift.

    NOTE: variance is E[y^2]-E[y]^2 in f32 (per-tile jnp.sum is a tree
    reduction, so error growth stays mild for realistic shortcut sizes)."""
    s = jnp.sum(sum_ref[...], axis=0)            # (1, Cout_pad)
    q = jnp.sum(ssq_ref[...], axis=0)            # (1, Cout_pad)
    mean = s * inv_m
    var = jnp.maximum(q * inv_m - mean * mean, 0.0)
    sc = g_ref[...] * lax.rsqrt(var + eps)
    scale_ref[...] = sc
    shift_ref[...] = b_ref[...] - mean * sc


def _stats_kernel(x_ref, w_ref, sum_ref, ssq_ref):
    """Fast path pass A: stats only (no conv-output store). grid=(cores,N,hw)."""
    @pl.when((pl.program_id(1) == 0) & (pl.program_id(2) == 0))
    def _():
        sum_ref[...] = jnp.zeros_like(sum_ref)
        ssq_ref[...] = jnp.zeros_like(ssq_ref)

    y = jnp.dot(x_ref[0], w_ref[...], preferred_element_type=jnp.float32)
    # Padded rows / K columns are exact zeros -> contribute nothing to stats.
    sum_ref[...] += jnp.sum(y, axis=0, keepdims=True)[None]
    ssq_ref[...] += jnp.sum(y * y, axis=0, keepdims=True)[None]


def _gemm_bn_kernel(inv_m, eps, cout,
                    x_ref, w_ref, sum_ref, ssq_ref, g_ref, b_ref,
                    o_ref, scale_ref, shift_ref):
    """Fast path pass B: re-do the 1x1 GEMM, fuse BN affine + NHWC->NCHW store.
    grid = (N, hw_tiles)."""
    @pl.when(pl.program_id(1) == 0)   # once per sample (hw axis is sequential)
    def _():
        _derive_scale_shift(inv_m, eps, sum_ref, ssq_ref, g_ref, b_ref,
                            scale_ref, shift_ref)

    y = jnp.dot(x_ref[0], w_ref[...], preferred_element_type=jnp.float32)
    o = y * scale_ref[...] + shift_ref[...]            # (tile_hw, Cout_pad)
    # Fused layout change: transpose in-kernel (XLU) and store channel-major.
    o_ref[0] = jnp.transpose(o)[:cout, :].astype(o_ref.dtype)


def _gemm_stats_store_kernel(x_ref, w_ref, y_ref, sum_ref, ssq_ref, acc_ref):
    """General path pass 1: K-tiled GEMM with f32 accumulator, fused stats,
    bf16 conv-output store. grid = (cores, N, hw_tiles_per_core, k_tiles)."""
    k = pl.program_id(3)

    @pl.when((pl.program_id(1) == 0) & (pl.program_id(2) == 0) & (k == 0))
    def _():
        sum_ref[...] = jnp.zeros_like(sum_ref)
        ssq_ref[...] = jnp.zeros_like(ssq_ref)

    @pl.when(k == 0)
    def _():
        acc_ref[...] = jnp.zeros_like(acc_ref)

    acc_ref[...] += jnp.dot(x_ref[0], w_ref[...], preferred_element_type=jnp.float32)

    @pl.when(k == pl.num_programs(3) - 1)
    def _():
        y = acc_ref[...]
        y_ref[0] = y.astype(y_ref.dtype)
        # Padded rows / channels are exact zeros -> contribute nothing to stats.
        sum_ref[...] += jnp.sum(y, axis=0, keepdims=True)[None]
        ssq_ref[...] += jnp.sum(y * y, axis=0, keepdims=True)[None]


def _bn_transpose_kernel(inv_m, eps, cout,
                         y_ref, sum_ref, ssq_ref, g_ref, b_ref,
                         o_ref, scale_ref, shift_ref):
    """General path pass 2: BN affine + fused NHWC->NCHW store. grid=(N,hw)."""
    @pl.when(pl.program_id(1) == 0)
    def _():
        _derive_scale_shift(inv_m, eps, sum_ref, ssq_ref, g_ref, b_ref,
                            scale_ref, shift_ref)

    o = y_ref[0].astype(jnp.float32) * scale_ref[...] + shift_ref[...]
    o_ref[0] = jnp.transpose(o)[:cout, :].astype(o_ref.dtype)


# ----------------------------------------------------------------------------
# pallas_call wrappers
# ----------------------------------------------------------------------------
def _run_stats_pass(rows, w_pad, ncores, htpc, tile_hw, core_sem, vmem_cap):
    N, HWp, Kp = rows.shape
    cout_pad = w_pad.shape[1]
    return pl.pallas_call(
        _stats_kernel,
        out_shape=(jax.ShapeDtypeStruct((ncores, 1, cout_pad), jnp.float32),
                   jax.ShapeDtypeStruct((ncores, 1, cout_pad), jnp.float32)),
        grid_spec=pltpu.PrefetchScalarGridSpec(
            num_scalar_prefetch=0,
            grid=(ncores, N, htpc),
            in_specs=[
                pl.BlockSpec((1, tile_hw, Kp), lambda c, n, h: (n, c * htpc + h, 0)),
                pl.BlockSpec((Kp, cout_pad), lambda c, n, h: (0, 0)),
            ],
            out_specs=[
                pl.BlockSpec((1, 1, cout_pad), lambda c, n, h: (c, 0, 0)),
                pl.BlockSpec((1, 1, cout_pad), lambda c, n, h: (c, 0, 0)),
            ],
        ),
        compiler_params=pltpu.CompilerParams(
            dimension_semantics=(core_sem, "arbitrary", "arbitrary"),
            vmem_limit_bytes=vmem_cap),
    )(rows, w_pad)


def _run_fused_gemm_bn(rows, w_pad, s, q, g_pad, b_pad, HW, cout, inv_m, eps,
                       tile_hw, hw_tiles, vmem_cap):
    N, HWp, Kp = rows.shape
    cout_pad = w_pad.shape[1]
    nstat = s.shape[0]
    kernel = functools.partial(_gemm_bn_kernel, inv_m, eps, cout)
    return pl.pallas_call(
        kernel,
        out_shape=jax.ShapeDtypeStruct((N, cout, HW), jnp.float32),
        grid_spec=pltpu.PrefetchScalarGridSpec(
            num_scalar_prefetch=0,
            grid=(N, hw_tiles),
            in_specs=[
                pl.BlockSpec((1, tile_hw, Kp), lambda n, h: (n, h, 0)),
                pl.BlockSpec((Kp, cout_pad), lambda n, h: (0, 0)),
                pl.BlockSpec((nstat, 1, cout_pad), lambda n, h: (0, 0, 0)),
                pl.BlockSpec((nstat, 1, cout_pad), lambda n, h: (0, 0, 0)),
                pl.BlockSpec((1, cout_pad), lambda n, h: (0, 0)),
                pl.BlockSpec((1, cout_pad), lambda n, h: (0, 0)),
            ],
            out_specs=pl.BlockSpec((1, cout, tile_hw), lambda n, h: (n, 0, h)),
            scratch_shapes=[pltpu.VMEM((1, cout_pad), jnp.float32),
                            pltpu.VMEM((1, cout_pad), jnp.float32)],
        ),
        compiler_params=pltpu.CompilerParams(
            dimension_semantics=("parallel", "arbitrary"),
            vmem_limit_bytes=vmem_cap),
    )(rows, w_pad, s, q, g_pad, b_pad)


def _run_gemm_stats_store(rows, w_pad, ncores, htpc, tile_hw, tile_k,
                          core_sem, vmem_cap):
    N, HWp, Kp = rows.shape
    cout_pad = w_pad.shape[1]
    k_tiles = Kp // tile_k
    return pl.pallas_call(
        _gemm_stats_store_kernel,
        out_shape=(jax.ShapeDtypeStruct((N, HWp, cout_pad), jnp.bfloat16),
                   jax.ShapeDtypeStruct((ncores, 1, cout_pad), jnp.float32),
                   jax.ShapeDtypeStruct((ncores, 1, cout_pad), jnp.float32)),
        grid_spec=pltpu.PrefetchScalarGridSpec(
            num_scalar_prefetch=0,
            grid=(ncores, N, htpc, k_tiles),
            in_specs=[
                pl.BlockSpec((1, tile_hw, tile_k),
                             lambda c, n, h, k: (n, c * htpc + h, k)),
                pl.BlockSpec((tile_k, cout_pad), lambda c, n, h, k: (k, 0)),
            ],
            out_specs=[
                pl.BlockSpec((1, tile_hw, cout_pad),
                             lambda c, n, h, k: (n, c * htpc + h, 0)),
                pl.BlockSpec((1, 1, cout_pad), lambda c, n, h, k: (c, 0, 0)),
                pl.BlockSpec((1, 1, cout_pad), lambda c, n, h, k: (c, 0, 0)),
            ],
            scratch_shapes=[pltpu.VMEM((tile_hw, cout_pad), jnp.float32)],
        ),
        compiler_params=pltpu.CompilerParams(
            dimension_semantics=(core_sem, "arbitrary", "arbitrary", "arbitrary"),
            vmem_limit_bytes=vmem_cap),
    )(rows, w_pad)


def _run_bn_transpose(y, s, q, g_pad, b_pad, HW, cout, inv_m, eps,
                      tile_hw, hw_tiles, vmem_cap):
    N, HWp, cout_pad = y.shape
    nstat = s.shape[0]
    kernel = functools.partial(_bn_transpose_kernel, inv_m, eps, cout)
    return pl.pallas_call(
        kernel,
        out_shape=jax.ShapeDtypeStruct((N, cout, HW), jnp.float32),
        grid_spec=pltpu.PrefetchScalarGridSpec(
            num_scalar_prefetch=0,
            grid=(N, hw_tiles),
            in_specs=[
                pl.BlockSpec((1, tile_hw, cout_pad), lambda n, h: (n, h, 0)),
                pl.BlockSpec((nstat, 1, cout_pad), lambda n, h: (0, 0, 0)),
                pl.BlockSpec((nstat, 1, cout_pad), lambda n, h: (0, 0, 0)),
                pl.BlockSpec((1, cout_pad), lambda n, h: (0, 0)),
                pl.BlockSpec((1, cout_pad), lambda n, h: (0, 0)),
            ],
            out_specs=pl.BlockSpec((1, cout, tile_hw), lambda n, h: (n, 0, h)),
            scratch_shapes=[pltpu.VMEM((1, cout_pad), jnp.float32),
                            pltpu.VMEM((1, cout_pad), jnp.float32)],
        ),
        compiler_params=pltpu.CompilerParams(
            dimension_semantics=("parallel", "arbitrary"),
            vmem_limit_bytes=vmem_cap),
    )(y, s, q, g_pad, b_pad)


# ----------------------------------------------------------------------------
# im2col glue (bf16 from the start; 1x1 conv = strided-slice fast path)
# ----------------------------------------------------------------------------
def _im2col_nhwc(x, kh, kw, stride, padding):
    N, C, H, W = x.shape
    if padding:
        x = jnp.pad(x, ((0, 0), (0, 0), (padding, padding), (padding, padding)))
    Hp, Wp = H + 2 * padding, W + 2 * padding
    Ho = (Hp - kh) // stride + 1
    Wo = (Wp - kw) // stride + 1
    if kh == 1 and kw == 1:
        rows = x[:, :, ::stride, ::stride][:, :, :Ho, :Wo]
        rows = rows.transpose(0, 2, 3, 1).reshape(N, Ho * Wo, C)
        return rows, Ho, Wo
    patches = []
    for i in range(kh):
        for j in range(kw):
            patches.append(x[:, :, i:i + Ho * stride:stride, j:j + Wo * stride:stride])
    p = jnp.stack(patches, axis=0).reshape(kh, kw, N, C, Ho, Wo)
    p = p.transpose(2, 4, 5, 3, 0, 1)          # (N, Ho, Wo, C, kh, kw) = OIHW flatten
    return p.reshape(N, Ho * Wo, C * kh * kw), Ho, Wo


# ----------------------------------------------------------------------------
# Forward: conv (no bias) + BatchNorm2d with training-mode batch statistics
# ----------------------------------------------------------------------------
def shortcut_forward(x_nchw, weight, gamma, beta, stride, padding, eps):
    ncores, vmem_cap, is_v7 = _chip_config()
    N = x_nchw.shape[0]
    Cout, Cin, kh, kw = weight.shape
    K = Cin * kh * kw
    cout_pad = _round_up(max(Cout, _LANE), _LANE)     # lane-dense BN math in-kernel

    # im2col directly in bf16 -> halves wrapper-side HBM traffic vs f32.
    rows, Ho, Wo = _im2col_nhwc(x_nchw.astype(jnp.bfloat16), kh, kw, stride, padding)
    HW = Ho * Wo
    M = N * HW
    inv_m = 1.0 / float(M)

    # 1x1 shortcut fast path: never materialize the conv output; pass A produces
    # only per-channel stats, pass B re-does the small GEMM fused with BN.
    fast = (kh == 1 and kw == 1 and K <= cout_pad
            and K * cout_pad * 2 <= 8 * (1 << 20))

    tile_k = K if fast else _pick_tile_k(K, cout_pad)
    Kp = K if tile_k == K else _round_up(K, tile_k)
    tile_hw = _pick_tile_hw(HW, tile_k, cout_pad, Cout, ncores, vmem_cap,
                            store_y=not fast)

    hw_tiles = _cdiv(HW, tile_hw)
    htpc = _cdiv(hw_tiles, ncores)            # hw tiles per TensorCore
    HWp = ncores * htpc * tile_hw             # per-sample padded row count

    rows = jnp.pad(rows, ((0, 0), (0, HWp - HW), (0, Kp - K)))

    w_mat = weight.reshape(Cout, K).T                              # (K, Cout)
    w_pad = jnp.pad(w_mat, ((0, Kp - K), (0, cout_pad - Cout))).astype(jnp.bfloat16)
    g_pad = jnp.pad(gamma.astype(jnp.float32), (0, cout_pad - Cout)).reshape(1, cout_pad)
    b_pad = jnp.pad(beta.astype(jnp.float32), (0, cout_pad - Cout)).reshape(1, cout_pad)

    core_sem = (getattr(pltpu, "CORE_PARALLEL", "parallel")
                if (is_v7 and ncores == 2) else "arbitrary")

    if fast:
        s, q = _run_stats_pass(rows, w_pad, ncores, htpc, tile_hw, core_sem, vmem_cap)
        out3 = _run_fused_gemm_bn(rows, w_pad, s, q, g_pad, b_pad, HW, Cout,
                                  inv_m, eps, tile_hw, hw_tiles, vmem_cap)
    else:
        y, s, q = _run_gemm_stats_store(rows, w_pad, ncores, htpc, tile_hw, tile_k,
                                        core_sem, vmem_cap)
        out3 = _run_bn_transpose(y, s, q, g_pad, b_pad, HW, Cout,
                                 inv_m, eps, tile_hw, hw_tiles, vmem_cap)

    # (N, Cout, Ho*Wo) -> (N, Cout, Ho, Wo) is a free metadata reshape (the
    # channel-major transpose already happened inside the kernel).
    return out3.reshape(N, Cout, Ho, Wo)


class ShortCutPallas:
    # TODO(synk): BatchNorm running_mean/running_var buffer updates (a training
    # side effect in PyTorch) are not tracked; only the forward output is computed.
    def __init__(self, in_channels, out_channels, kernel_size, stride, padding=0,
                 key=None):
        if key is None:
            key = jax.random.PRNGKey(0)
        self.in_channels = in_channels
        self.out_channels = out_channels
        self.kernel_size = kernel_size
        self.stride = stride
        self.padding = padding
        self.eps = 1e-5

        kw_, kg, kb = jax.random.split(key, 3)
        fan_in = in_channels * kernel_size * kernel_size
        bound = 1.0 / float(jnp.sqrt(fan_in))
        # conv weight, OIHW like PyTorch (Cout, Cin, kh, kw)
        self.weight = jax.random.uniform(
            kw_, (out_channels, in_channels, kernel_size, kernel_size),
            minval=-bound, maxval=bound, dtype=jnp.float32)
        # BN affine params (non-trivial values for a stronger test)
        self.gamma = jax.random.uniform(kg, (out_channels,), minval=0.5, maxval=1.5,
                                        dtype=jnp.float32)
        self.beta = 0.1 * jax.random.normal(kb, (out_channels,), dtype=jnp.float32)

    def __call__(self, x_nchw):
        return shortcut_forward(x_nchw, self.weight, self.gamma, self.beta,
                                self.stride, self.padding, self.eps)


# ----------------------------------------------------------------------------
# Pure-JAX reference (conv + training-mode BN)
# ----------------------------------------------------------------------------
def _reference(x, weight, gamma, beta, stride, padding, eps):
    y = lax.conv_general_dilated(
        x.astype(jnp.float32), weight.astype(jnp.float32),
        window_strides=(stride, stride),
        padding=[(padding, padding), (padding, padding)],
        dimension_numbers=("NCHW", "OIHW", "NCHW"),
        precision=lax.Precision.HIGHEST)
    mean = y.mean(axis=(0, 2, 3), keepdims=True)
    var = y.var(axis=(0, 2, 3), keepdims=True)     # biased, as in BN training mode
    xhat = (y - mean) / jnp.sqrt(var + eps)
    return gamma.reshape(1, -1, 1, 1) * xhat + beta.reshape(1, -1, 1, 1)


def _check(x, mod, stride, padding, tol):
    out = jax.block_until_ready(mod(x))
    # reference at matched operand precision (the MXU runs bf16 operands;
    # accumulation, stats and the BN affine stay f32)
    x_q = x.astype(jnp.bfloat16).astype(jnp.float32)
    w_q = mod.weight.astype(jnp.bfloat16).astype(jnp.float32)
    ref_q = _reference(x_q, w_q, mod.gamma, mod.beta, stride, padding, mod.eps)
    assert out.shape == ref_q.shape, (out.shape, ref_q.shape)
    err = float(jnp.max(jnp.abs(out - ref_q)))
    assert jnp.allclose(out, ref_q, rtol=tol, atol=tol), err
    return out


if __name__ == "__main__":
    key = jax.random.PRNGKey(0)

    # --- Test 1: classic ResNet shortcut (1x1 conv, stride 2) -> fast path ---
    k_x, k_p = jax.random.split(jax.random.fold_in(key, 1))
    N, Cin, H, W = 2, 4, 16, 16
    Cout, ksize, stride, padding = 8, 1, 2, 0
    x = jax.random.normal(k_x, (N, Cin, H, W), dtype=jnp.float32)
    mod = ShortCutPallas(Cin, Cout, ksize, stride, padding, key=k_p)
    out = _check(x, mod, stride, padding, tol=3e-2)
    # also sanity-check against the exact f32 reference (loose: bf16 policy)
    ref = _reference(x, mod.weight, mod.gamma, mod.beta, stride, padding, mod.eps)
    assert jnp.allclose(out, ref, rtol=8e-2, atol=8e-2), \
        float(jnp.max(jnp.abs(out - ref)))

    # --- Test 2: 3x3 conv, stride 1, pad 1 -> general path (y intermediate) ---
    k_x, k_p = jax.random.split(jax.random.fold_in(key, 2))
    x = jax.random.normal(k_x, (2, 4, 16, 16), dtype=jnp.float32)
    mod = ShortCutPallas(4, 8, 3, 1, 1, key=k_p)
    _check(x, mod, 1, 1, tol=3e-2)

    # --- Test 3: long-K 3x3 conv -> exercises the K-tiled accumulator path ---
    k_x, k_p = jax.random.split(jax.random.fold_in(key, 3))
    x = jax.random.normal(k_x, (1, 256, 8, 8), dtype=jnp.float32)
    mod = ShortCutPallas(256, 32, 3, 1, 1, key=k_p)
    _check(x, mod, 1, 1, tol=3e-2)

    print("KERNEL_OK")
</pallas_src>

<mosaic_0001>
module attributes {stable_mosaic.version = 11 : i64} {
  func.func @_stats_kernel(%arg0: i32, %arg1: i32, %arg2: i32, %arg3: memref<1x64x4xbf16, #tpu.memory_space<vmem>>, %arg4: memref<4x128xbf16, #tpu.memory_space<vmem>>, %arg5: memref<1x1x128xf32, #tpu.memory_space<vmem>>, %arg6: memref<1x1x128xf32, #tpu.memory_space<vmem>>) attributes {dimension_semantics = [#tpu.dimension_semantics<arbitrary>, #tpu.dimension_semantics<arbitrary>, #tpu.dimension_semantics<arbitrary>], iteration_bounds = array<i64: 1, 2, 1>, scalar_prefetch = 0 : i64, scratch_operands = 0 : i64, tpu.core_type = #tpu.core_type<tc>, window_params = [{transform_indices = @transform_0, window_bounds = array<i64: 1, 64, 4>}, {pipeline_mode = #tpu.pipeline_mode<synchronous>, transform_indices = @transform_1, window_bounds = array<i64: 4, 128>}, {transform_indices = @transform_2, window_bounds = array<i64: 1, 1, 128>}, {transform_indices = @transform_3, window_bounds = array<i64: 1, 1, 128>}]} {
    %c0_i32 = arith.constant 0 : i32
    %0 = arith.cmpi eq, %arg1, %c0_i32 : i32
    %c0_i32_0 = arith.constant 0 : i32
    %1 = arith.cmpi eq, %arg2, %c0_i32_0 : i32
    %2 = arith.andi %0, %1 : i1
    %3 = arith.extui %2 : i1 to i32
    %c0_i32_1 = arith.constant 0 : i32
    %4 = arith.cmpi ne, %3, %c0_i32_1 : i32
    scf.if %4 {
      %cst_20 = arith.constant 0.000000e+00 : f32
      %22 = vector.broadcast %cst_20 : f32 to vector<1x1x128xf32>
      %c0_21 = arith.constant 0 : index
      %c0_22 = arith.constant 0 : index
      %c0_23 = arith.constant 0 : index
      %23 = vector.load %arg5[%c0_21, %c0_22, %c0_23] : memref<1x1x128xf32, #tpu.memory_space<vmem>>, vector<1x1x128xf32>
      tpu.vector_store %arg5[%c0_21, %c0_22, %c0_23], %22 {strides = array<i32>} : memref<1x1x128xf32, #tpu.memory_space<vmem>>, vector<1x1x128xf32>,
      %cst_24 = arith.constant 0.000000e+00 : f32
      %24 = vector.broadcast %cst_24 : f32 to vector<1x1x128xf32>
      %c0_25 = arith.constant 0 : index
      %c0_26 = arith.constant 0 : index
      %c0_27 = arith.constant 0 : index
      %25 = vector.load %arg6[%c0_25, %c0_26, %c0_27] : memref<1x1x128xf32, #tpu.memory_space<vmem>>, vector<1x1x128xf32>
      tpu.vector_store %arg6[%c0_25, %c0_26, %c0_27], %24 {strides = array<i32>} : memref<1x1x128xf32, #tpu.memory_space<vmem>>, vector<1x1x128xf32>,
    } else {
    }
    %c0 = arith.constant 0 : index
    %c0_2 = arith.constant 0 : index
    %c0_3 = arith.constant 0 : index
    %5 = vector.load %arg3[%c0, %c0_2, %c0_3] : memref<1x64x4xbf16, #tpu.memory_space<vmem>>, vector<1x64x4xbf16>
    %6 = vector.shape_cast %5 : vector<1x64x4xbf16> to vector<64x4xbf16>
    %c0_4 = arith.constant 0 : index
    %c0_5 = arith.constant 0 : index
    %7 = vector.load %arg4[%c0_4, %c0_5] : memref<4x128xbf16, #tpu.memory_space<vmem>>, vector<4x128xbf16>
    %cst = arith.constant dense<0.000000e+00> : vector<64x128xf32>
    %8 = tpu.matmul %6, %7, %cst {dimension_numbers = #tpu.dot_dimension_numbers<[1], [0], [0], [1], [0, 0, 1, 1], [], []>} : vector<64x4xbf16>, vector<4x128xbf16>, vector<64x128xf32> -> vector<64x128xf32>
    %c0_6 = arith.constant 0 : index
    %c0_7 = arith.constant 0 : index
    %c0_8 = arith.constant 0 : index
    %9 = vector.load %arg5[%c0_6, %c0_7, %c0_8] : memref<1x1x128xf32, #tpu.memory_space<vmem>>, vector<1x1x128xf32>
    %cst_9 = arith.constant dense<0.000000e+00> : vector<128xf32>
    %10 = vector.multi_reduction <add>, %8, %cst_9 [0] : vector<64x128xf32> to vector<128xf32>
    %11 = vector.shape_cast %10 : vector<128xf32> to vector<1x128xf32>
    %12 = vector.shape_cast %11 : vector<1x128xf32> to vector<1x1x128xf32>
    %13 = arith.addf %9, %12 : vector<1x1x128xf32>
    %c0_10 = arith.constant 0 : index
    %c0_11 = arith.constant 0 : index
    %c0_12 = arith.constant 0 : index
    %14 = vector.load %arg5[%c0_10, %c0_11, %c0_12] : memref<1x1x128xf32, #tpu.memory_space<vmem>>, vector<1x1x128xf32>
    tpu.vector_store %arg5[%c0_10, %c0_11, %c0_12], %13 {strides = array<i32>} : memref<1x1x128xf32, #tpu.memory_space<vmem>>, vector<1x1x128xf32>,
    %c0_13 = arith.constant 0 : index
    %c0_14 = arith.constant 0 : index
    %c0_15 = arith.constant 0 : index
    %15 = vector.load %arg6[%c0_13, %c0_14, %c0_15] : memref<1x1x128xf32, #tpu.memory_space<vmem>>, vector<1x1x128xf32>
    %16 = arith.mulf %8, %8 : vector<64x128xf32>
    %cst_16 = arith.constant dense<0.000000e+00> : vector<128xf32>
    %17 = vector.multi_reduction <add>, %16, %cst_16 [0] : vector<64x128xf32> to vector<128xf32>
    %18 = vector.shape_cast %17 : vector<128xf32> to vector<1x128xf32>
    %19 = vector.shape_cast %18 : vector<1x128xf32> to vector<1x1x128xf32>
    %20 = arith.addf %15, %19 : vector<1x1x128xf32>
    %c0_17 = arith.constant 0 : index
    %c0_18 = arith.constant 0 : index
    %c0_19 = arith.constant 0 : index
    %21 = vector.load %arg6[%c0_17, %c0_18, %c0_19] : memref<1x1x128xf32, #tpu.memory_space<vmem>>, vector<1x1x128xf32>
    tpu.vector_store %arg6[%c0_17, %c0_18, %c0_19], %20 {strides = array<i32>} : memref<1x1x128xf32, #tpu.memory_space<vmem>>, vector<1x1x128xf32>,
    return
  }
  func.func @transform_0(%arg0: i32, %arg1: i32, %arg2: i32) -> (i32, i32, i32) {
    %c1_i32 = arith.constant 1 : i32
    %0 = arith.muli %arg0, %c1_i32 : i32
    %1 = arith.addi %0, %arg2 : i32
    %c0_i32 = arith.constant 0 : i32
    %c0_i32_0 = arith.constant 0 : i32
    return %arg1, %1, %c0_i32 : i32, i32, i32
  }
  func.func @transform_1(%arg0: i32, %arg1: i32, %arg2: i32) -> (i32, i32) {
    %c0_i32 = arith.constant 0 : i32
    %c0_i32_0 = arith.constant 0 : i32
    %c0_i32_1 = arith.constant 0 : i32
    return %c0_i32, %c0_i32_0 : i32, i32
  }
  func.func @transform_2(%arg0: i32, %arg1: i32, %arg2: i32) -> (i32, i32, i32) {
    %c0_i32 = arith.constant 0 : i32
    %c0_i32_0 = arith.constant 0 : i32
    %c0_i32_1 = arith.constant 0 : i32
    return %arg0, %c0_i32, %c0_i32_0 : i32, i32, i32
  }
  func.func @transform_3(%arg0: i32, %arg1: i32, %arg2: i32) -> (i32, i32, i32) {
    %c0_i32 = arith.constant 0 : i32
    %c0_i32_0 = arith.constant 0 : i32
    %c0_i32_1 = arith.constant 0 : i32
    return %arg0, %c0_i32, %c0_i32_0 : i32, i32, i32
  }
}

</mosaic_0001>

<llo_original>
// kernel: tpu_custom_call.1
$region0: #{tpu_custom_call.1}
  #allocation0 [shape = 'u32[]', space=smem, size = 0x4, offset = 0x4, fixed_abs, tag = 'smem constant byte address 0x4 - core index']
  #allocation1 [shape = 'u32[144,128]{1,0:T(1,128)}', space=vmem, size = 0x12000, scoped, tag = 'internal scratch']
  %s0 = inlined_call_operand.vmem [shape: bf16[2,64,4], index: 0, kind: input, shape index: {}]
  %s1 = inlined_call_operand.vmem [shape: bf16[4,128], index: 1, kind: input, shape index: {}]
  %s2 = inlined_call_operand.hbm [shape: f32[1,1,128], index: 2, kind: output, shape index: {0}]
  %s3 = inlined_call_operand.hbm [shape: f32[1,1,128], index: 3, kind: output, shape index: {1}]
  %4 = xla_tuple %s2, %s3
  %s5 = sld [smem:[#allocation0]]
  $region53: #{tpu_custom_call.1} parent=0
    _
  %s7 = ssub.s32 1, %s5
  %s8 = scalar_select 0, %s7, %s5
  $region1: #{tpu_custom_call.1} parent=0
    #allocation2 [shape = 'u8[512]{0}', space=vmem, size = 0x400, scoped, tag = 'output window, operand 0, single buffered']
    #allocation3 [shape = 's32[2]{0}', space=sflag, size = 0x8, scoped, tag = 'scoped memory for tpu_custom_call.1']
    #allocation4 [shape = 'u8[512]{0}', space=vmem, size = 0x400, scoped, tag = 'output window, operand 1, single buffered']
    #allocation5 [shape = 's32[1]{0}', space=sflag, size = 0x4, scoped, tag = 'scoped memory for tpu_custom_call.1']
    %9 = vsyncpa [#allocation3], 0
    %10 = vsyncpa [#allocation5], 0
    loop: start=0, step=1, limit=4
    $region2: #{tpu_custom_call.1} parent=1 // loop_pre_header
      _
    $region3: #{tpu_custom_call.1} parent=1 // loop_header
      %s12 = sphi 0, %s16
      %p13 = scmp.ge.s32.totalorder %s12, 4
      %s19 = sphi 0, %s38
      %s20 = sphi 0, %s34
      %s21 = sphi 0, %s30
      %s22 = sphi 0, %s19
      %s23 = sphi 0, %s20
      %s24 = sphi 0, %s21
      %s25 = sphi 0, %s22
      %s26 = sphi 0, %s23
      %s27 = sphi 0, %s24
      %s45 = sphi 0, %s47
      %s48 = sphi 0, %s45
      %s49 = sphi 0, %s48
      %s65 = sphi 0, %s49
      %s69 = sphi 0, %s69
      %s71 = sphi 0, %s69
      %s72 = sphi 0, %s71
      %s86 = sphi 0, %s72
      %s92 = sphi 0, %s94
      %s95 = sphi 0, %s92
      %s96 = sphi 0, %s95
      %s112 = sphi 0, %s96
      %s118 = sphi 0, %s120
      %s121 = sphi 0, %s118
      %s122 = sphi 0, %s121
      %s138 = sphi 0, %s122
    $region4: #{tpu_custom_call.1} parent=1 // loop_header_branch
      %15 = sbr.rel (%p13) target = $region8
    $region5: #{tpu_custom_call.1} parent=1 // loop_body
      %s17 = ssub.s32 %s12, 1
      %s18 = ssub.s32 %s12, 2
      %s28 = sadd.s32 1, %s21
      %p29 = scmp.ge.s32.totalorder %s28, 1
      %s30 = scalar_select %p29, 0, %s28
      %s31 = sadd.s32 1, %s20
      %s32 = scalar_select %p29, %s31, %s20
      %p33 = scmp.ge.s32.totalorder %s32, 2
      %s34 = scalar_select %p33, 0, %s32
      %s35 = sadd.s32 1, %s19
      %s36 = scalar_select %p33, %s35, %s19
      %p37 = scmp.ge.s32.totalorder %s36, 1
      %s38 = scalar_select %p37, 0, %s36
      %s39 = sadd.s32 %s19, %s21
      %s40 = sadd.s32 %s38, %s30
      %s41 = ssub.s32 %s20, %s34
      %s42 = ssub.s32 %s39, %s40
      %s43 = sor.u32 %s41, %s42
      %p44 = scmp.eq.s32.totalorder %s43, 0
      %s46 = sadd.s32 %s45, 1
      %s47 = scalar_select %p44, %s45, %s46
      %p50 = pneg %p44
      %p51 = scmp.eq.s32.totalorder %s12, 1
      %p52 = por %p50, %p51
      %p53 = scmp.ne.s32.totalorder %s45, %s48
      %p54 = scmp.eq.s32.totalorder %s12, 0
      %p55 = por %p53, %p54
      %p56 = scmp.ne.s32.totalorder %s45, %s48
      %p57 = scmp.eq.s32.totalorder %s17, 1
      %p58 = por %p56, %p57
      %p59 = scmp.ne.s32.totalorder %s48, %s49
      %p60 = scmp.eq.s32.totalorder %s17, 0
      %p61 = por %p59, %p60
      %p62 = scmp.ne.s32.totalorder %s48, %s49
      %p63 = scmp.eq.s32.totalorder %s18, 1
      %p64 = por %p62, %p63
      %p66 = scmp.ne.s32.totalorder %s49, %s65
      %p67 = scmp.eq.s32.totalorder %s18, 0
      %p68 = por %p66, %p67
      %s70 = sadd.s32 %s69, 1
      %p73 = scmp.eq.s32.totalorder %s12, 1
      %p74 = scmp.ne.s32.totalorder %s69, %s71
      %p75 = scmp.eq.s32.totalorder %s12, 0
      %p76 = por %p74, %p75
      %p77 = scmp.ne.s32.totalorder %s69, %s71
      %p78 = scmp.eq.s32.totalorder %s17, 1
      %p79 = por %p77, %p78
      %p80 = scmp.ne.s32.totalorder %s71, %s72
      %p81 = scmp.eq.s32.totalorder %s17, 0
      %p82 = por %p80, %p81
      %p83 = scmp.ne.s32.totalorder %s71, %s72
      %p84 = scmp.eq.s32.totalorder %s18, 1
      %p85 = por %p83, %p84
      %p87 = scmp.ne.s32.totalorder %s72, %s86
      %p88 = scmp.eq.s32.totalorder %s18, 0
      %p89 = por %p87, %p88
      %s90 = ssub.s32 %s19, %s38
      %p91 = scmp.eq.s32.totalorder %s90, 0
      %s93 = sadd.s32 %s92, 1
      %s94 = scalar_select %p91, %s92, %s93
      %p97 = pneg %p91
      %p98 = scmp.eq.s32.totalorder %s12, 1
      %p99 = por %p97, %p98
      %p100 = scmp.ne.s32.totalorder %s92, %s95
      %p101 = scmp.eq.s32.totalorder %s12, 0
      %p102 = por %p100, %p101
      %p103 = scmp.ne.s32.totalorder %s92, %s95
      %p104 = scmp.eq.s32.totalorder %s17, 1
      %p105 = por %p103, %p104
      %p106 = scmp.ne.s32.totalorder %s95, %s96
      %p107 = scmp.eq.s32.totalorder %s17, 0
      %p108 = por %p106, %p107
      %p109 = scmp.ne.s32.totalorder %s95, %s96
      %p110 = scmp.eq.s32.totalorder %s18, 1
      %p111 = por %p109, %p110
      %p113 = scmp.ne.s32.totalorder %s96, %s112
      %p114 = scmp.eq.s32.totalorder %s18, 0
      %p115 = por %p113, %p114
      %s116 = ssub.s32 %s19, %s38
      %p117 = scmp.eq.s32.totalorder %s116, 0
      %s119 = sadd.s32 %s118, 1
      %s120 = scalar_select %p117, %s118, %s119
      %p123 = pneg %p117
      %p124 = scmp.eq.s32.totalorder %s12, 1
      %p125 = por %p123, %p124
      %p126 = scmp.ne.s32.totalorder %s118, %s121
      %p127 = scmp.eq.s32.totalorder %s12, 0
      %p128 = por %p126, %p127
      %p129 = scmp.ne.s32.totalorder %s118, %s121
      %p130 = scmp.eq.s32.totalorder %s17, 1
      %p131 = por %p129, %p130
      %p132 = scmp.ne.s32.totalorder %s121, %s122
      %p133 = scmp.eq.s32.totalorder %s17, 0
      %p134 = por %p132, %p133
      %p135 = scmp.ne.s32.totalorder %s121, %s122
      %p136 = scmp.eq.s32.totalorder %s18, 1
      %p137 = por %p135, %p136
      %p139 = scmp.ne.s32.totalorder %s122, %s138
      %p140 = scmp.eq.s32.totalorder %s18, 0
      %p141 = por %p139, %p140
      %p142 = scmp.le.s32.totalorder 1, %s12
      %p143 = scmp.lt.s32.totalorder %s12, 3
      %p144 = pnand %p142, %p143
      %p145 = pneg %p144
      // Predicated region
      $region9: #{tpu_custom_call.1} parent=5 // pred_check
        _
      $region10: #{tpu_custom_call.1} parent=5 // pred_check_branch
        %147 = sbr.rel (%p144) target = $region12
      $region11: #{tpu_custom_call.1} parent=5 // pred_region
        %s148 = ssub.s32 %s12, 1
        // Predicated region
        $region13: #{tpu_custom_call.1} parent=11 // pred_check
          %p149 = pneg %p82
        $region14: #{tpu_custom_call.1} parent=11 // pred_check_branch
          %151 = sbr.rel (%p149) target = $region16
        $region15: #{tpu_custom_call.1} parent=11 // pred_region
          _
        $region16: #{tpu_custom_call.1} parent=11 // pred_fallthru
          _
      $region12: #{tpu_custom_call.1} parent=5 // pred_fallthru
        _
      %p152 = scmp.lt.s32.totalorder %s12, 2
      // Predicated region
      $region17: #{tpu_custom_call.1} parent=5 // pred_check
        %p153 = pneg %p152
      $region18: #{tpu_custom_call.1} parent=5 // pred_check_branch
        %155 = sbr.rel (%p153) target = $region20
      $region19: #{tpu_custom_call.1} parent=5 // pred_region
        // Predicated region
        $region21: #{tpu_custom_call.1} parent=19 // pred_check
          %p156 = pneg %p55
        $region22: #{tpu_custom_call.1} parent=19 // pred_check_branch
          %158 = sbr.rel (%p156) target = $region24
        $region23: #{tpu_custom_call.1} parent=19 // pred_region
          %s159 = sadd.s32 %s19, %s21
          %s160 = smul.u32 8, %s159
          %p161 = scmp.lt.s32.totalorder %s20, 1
          %s162 = scalar_select %p161, %s20, 1
          %p163 = scmp.lt.s32.totalorder %s160, 7
          %s164 = scalar_select %p163, %s160, 7
          %s165 = smul.addr %s162, 8
          %s166 = sadd.s32 %s164, %s165
          %s167 = smul.addr %s166, 4
          %s168 = scalar_lea.vmem %s0, %s167
          %s169 = sadd.s32 %s19, %s21
          %s170 = smul.u32 8, %s169
        $region24: #{tpu_custom_call.1} parent=19 // pred_fallthru
          _
      $region20: #{tpu_custom_call.1} parent=5 // pred_fallthru
        _
      %p171 = scmp.le.s32.totalorder 1, %s12
      %p172 = scmp.lt.s32.totalorder %s12, 3
      %p173 = pnand %p171, %p172
      %p174 = pneg %p173
      // Predicated region
      $region25: #{tpu_custom_call.1} parent=5 // pred_check
        _
      $region26: #{tpu_custom_call.1} parent=5 // pred_check_branch
        %176 = sbr.rel (%p173) target = $region28
      $region27: #{tpu_custom_call.1} parent=5 // pred_region
        %s177 = ssub.s32 %s12, 1
        %s178 = sadd.s32 %s22, %s24
        %s179 = smul.u32 8, %s178
        %p180 = scmp.lt.s32.totalorder %s23, 1
        %s181 = scalar_select %p180, %s23, 1
        %p182 = scmp.lt.s32.totalorder %s179, 7
        %s183 = scalar_select %p182, %s179, 7
        %s184 = smul.addr %s181, 8
        %s185 = sadd.s32 %s183, %s184
        %s186 = smul.addr %s185, 4
        %s187 = scalar_lea.vmem %s0, %s186
        %p188 = pneg %p61
        %p189 = pneg %p58
        %p190 = pneg %p82
        %p191 = pneg %p79
        %p192 = pneg %p108
        %p193 = pneg %p105
        %p194 = pneg %p134
        %p195 = pneg %p131
        %s196 = sadd.s32 %s22, %s24
        %s197 = smul.u32 8, %s196
        %p198 = scmp.lt.s32.totalorder %s23, 1
        %s199 = scalar_select %p198, %s23, 1
        %p200 = scmp.lt.s32.totalorder %s197, 7
        %s201 = scalar_select %p200, %s197, 7
        %s202 = smul.addr %s199, 8
        %s203 = sadd.s32 %s201, %s202
        %s204 = smul.addr %s203, 4
        %s205 = scalar_lea.vmem %s0, %s204
        %s206 = sadd.s32 %s22, %s24
        %s207 = smul.u32 8, %s206
        %p209 = scmp.eq.s32.totalorder %s23, 0
        %p210 = scmp.eq.s32.totalorder %s24, 0
        %p211 = pnand %p209, %p210
        %p212 = pneg %p211
        // Predicated region
        $region29: #{tpu_custom_call.1} parent=27 // pred_check
          _
        $region30: #{tpu_custom_call.1} parent=27 // pred_check_branch
          %214 = sbr.rel (%p211) target = $region32
        $region31: #{tpu_custom_call.1} parent=27 // pred_region
          %215 = vst [vmem:[#allocation2] sm:$0x1] 0.0
          %216 = vst [vmem:[#allocation4] sm:$0x1] 0.0
        $region32: #{tpu_custom_call.1} parent=27 // pred_fallthru
          _
        %v217 = vld [vmem:[%s205] sm:$0xf]
        %v218 = vld [vmem:[%s205 + $0x4] sm:$0xf]
        %v219 = vld [vmem:[%s205 + $0x8] sm:$0xf]
        %v220 = vld [vmem:[%s205 + $0xc] sm:$0xf]
        %v221 = vld [vmem:[%s205 + $0x10] sm:$0xf]
        %v222 = vld [vmem:[%s205 + $0x14] sm:$0xf]
        %v223 = vld [vmem:[%s205 + $0x18] sm:$0xf]
        %v224 = vld [vmem:[%s205 + $0x1c] sm:$0xf]
        %v225 = vld [vmem:[%s1] sm:$0x3]
        %v234 = vunpack.c.l.b16 %v217
        %v235 = vunpack.c.l.b16 %v218
        %v236 = vunpack.c.l.b16 %v219
        %v237 = vunpack.c.l.b16 %v220
        %v238 = vunpack.c.l.b16 %v221
        %v239 = vunpack.c.l.b16 %v222
        %v240 = vunpack.c.l.b16 %v223
        %v241 = vunpack.c.l.b16 %v224
        %v242 = vpack.c.b16 %v235, %v234
        %v243 = vpack.c.b16 %v237, %v236
        %v244 = vpack.c.b16 %v239, %v238
        %v245 = vpack.c.b16 %v241, %v240
        %vm246 = vcmask 31744
        %v248 = vsel %vm246, %v242, 0
        %v251 = vsel %vm246, %v243, 0
        %v254 = vsel %vm246, %v244, 0
        %v257 = vsel %vm246, %v245, 0
        %vm259 = vcmask 1041408
        %v261 = vsel %vm259, %v225, 0
        %263 = vmatprep.subr.bf16.mxu0 0
        %264 = vmatpush1.bf16.msra.mxu0 0
        %265 = vmatprep.subr.bf16.mxu0 0
        %266 = vmatpush1.bf16.msra.mxu0 0
        %267 = vmatprep.subr.bf16.mxu0 0
        %268 = vmatpush1.bf16.msra.mxu0 0
        %269 = vmatprep.subr.bf16.mxu0 0
        %270 = vmatpush1.bf16.msra.mxu0 0
        %271 = vmatprep.subr.bf16.mxu0 0
        %272 = vmatpush1.bf16.msra.mxu0 0
        %273 = vmatprep.subr.bf16.mxu0 0
        %274 = vmatpush1.bf16.msra.mxu0 0
        %275 = vmatprep.subr.bf16.mxu0 0
        %276 = vmatpush1.bf16.msra.mxu0 0
        %277 = vmatprep.subr.bf16.mxu0 0
        %278 = vmatpush1.bf16.msra.mxu0 %v261
        %279 = vmatprep.subr.bf16.mxu0 0
        %280 = vmatpush2.bf16.msra.mxu0 0
        %281 = vmatprep.subr.bf16.mxu0 0
        %282 = vmatpush2.bf16.msra.mxu0 0
        %283 = vmatprep.subr.bf16.mxu0 0
        %284 = vmatpush2.bf16.msra.mxu0 0
        %285 = vmatprep.subr.bf16.mxu0 0
        %286 = vmatpush2.bf16.msra.mxu0 0
        %287 = vmatprep.subr.bf16.mxu0 0
        %288 = vmatpush2.bf16.msra.mxu0 0
        %289 = vmatprep.subr.bf16.mxu0 0
        %290 = vmatpush2.bf16.msra.mxu0 0
        %291 = vmatprep.subr.bf16.mxu0 0
        %292 = vmatpush2.bf16.msra.mxu0 0
        %293 = vmatprep.subr.bf16.mxu0 0
        %294 = vmatpush2.bf16.msra.mxu0 0
        %295 = vmatprep.mubr.bf16.mxu0 0
        %296 = vmatmul.mubr.bf16.gmra.mxu0 %v248
        %v297 = vpop.f32.mrf.mxu0
        %v298 = vadd.f32 0.0, %v297
        %v299 = vpop.f32.mrf.mxu0
        %v300 = vpop.f32.mrf.mxu0
        %v301 = vadd.f32 0.0, %v300
        %v302 = vpop.f32.mrf.mxu0
        %303 = vmatprep.mubr.bf16.mxu0 0
        %304 = vmatmul.mubr.bf16.gmra.mxu0 %v251
        %v305 = vpop.f32.mrf.mxu0
        %v306 = vadd.f32 0.0, %v305
        %v307 = vpop.f32.mrf.mxu0
        %v308 = vpop.f32.mrf.mxu0
        %v309 = vadd.f32 0.0, %v308
        %v310 = vpop.f32.mrf.mxu0
        %311 = vmatprep.mubr.bf16.mxu0 0
        %312 = vmatmul.mubr.bf16.gmra.mxu0 %v254
        %v313 = vpop.f32.mrf.mxu0
        %v314 = vadd.f32 0.0, %v313
        %v315 = vpop.f32.mrf.mxu0
        %v316 = vpop.f32.mrf.mxu0
        %v317 = vadd.f32 0.0, %v316
        %v318 = vpop.f32.mrf.mxu0
        %319 = vmatprep.mubr.bf16.mxu0 0
        %320 = vmatmul.mubr.bf16.gmra.mxu0 %v257
        %v321 = vpop.f32.mrf.mxu0
        %v322 = vadd.f32 0.0, %v321
        %v323 = vpop.f32.mrf.mxu0
        %v324 = vpop.f32.mrf.mxu0
        %v325 = vadd.f32 0.0, %v324
        %v326 = vpop.f32.mrf.mxu0
        %327 = vdwg.mxu0
        %v328 = vld [vmem:[#allocation2] sm:$0x1]
        %v329 = vadd.f32 %v298, %v301
        %v330 = vadd.f32 %v329, %v306
        %v331 = vadd.f32 %v330, %v309
        %v332 = vadd.f32 %v331, %v314
        %v333 = vadd.f32 %v332, %v317
        %v334 = vadd.f32 %v333, %v322
        %v335 = vadd.f32 %v334, %v325
        %v336 = vrot.slane %v335, 4
        %v337 = vadd.f32 %v335, %v336
        %v338 = vrot.slane %v337, 2
        %v339 = vadd.f32 %v337, %v338
        %v340 = vrot.slane %v339, 1
        %v341 = vadd.f32 %v339, %v340
        %v342 = vadd.f32 %v328, %v341
        %343 = vst [vmem:[#allocation2] sm:$0x1] %v342
        %v344 = vld [vmem:[#allocation4] sm:$0x1]
        %v345 = vmul.f32 %v298, %v298
        %v346 = vmul.f32 %v301, %v301
        %v347 = vmul.f32 %v306, %v306
        %v348 = vmul.f32 %v309, %v309
        %v349 = vmul.f32 %v314, %v314
        %v350 = vmul.f32 %v317, %v317
        %v351 = vmul.f32 %v322, %v322
        %v352 = vmul.f32 %v325, %v325
        %v353 = vadd.f32 %v345, %v346
        %v354 = vadd.f32 %v353, %v347
        %v355 = vadd.f32 %v354, %v348
        %v356 = vadd.f32 %v355, %v349
        %v357 = vadd.f32 %v356, %v350
        %v358 = vadd.f32 %v357, %v351
        %v359 = vadd.f32 %v358, %v352
        %v360 = vrot.slane %v359, 4
        %v361 = vadd.f32 %v359, %v360
        %v362 = vrot.slane %v361, 2
        %v363 = vadd.f32 %v361, %v362
        %v364 = vrot.slane %v363, 1
        %v365 = vadd.f32 %v363, %v364
        %v366 = vadd.f32 %v344, %v365
        %367 = vst [vmem:[#allocation4] sm:$0x1] %v366
        // Predicated region
        $region33: #{tpu_custom_call.1} parent=27 // pred_check
          %p368 = pneg %p105
        $region34: #{tpu_custom_call.1} parent=27 // pred_check_branch
          %370 = sbr.rel (%p368) target = $region36
        $region35: #{tpu_custom_call.1} parent=27 // pred_region
          %s372 = ssub.s32 16, 16
          %373 = vsyncadd [#allocation3], %s372
          %s374 = smul.addr %s22, 16
          %s375 = scalar_lea.hbm %s2, %s374
          %s377 = sshll.u32 [#allocation2], 4
          %s378 = int_to_ptr.vmem [resolvable:$true] %s377
          %380 = dma.vmem_to_hbm [thread:$0]  %s378, 16, %s375, [#allocation3]
        $region36: #{tpu_custom_call.1} parent=27 // pred_fallthru
          _
        // Predicated region
        $region37: #{tpu_custom_call.1} parent=27 // pred_check
          %p381 = pneg %p131
        $region38: #{tpu_custom_call.1} parent=27 // pred_check_branch
          %383 = sbr.rel (%p381) target = $region40
        $region39: #{tpu_custom_call.1} parent=27 // pred_region
          %s385 = ssub.s32 16, 16
          %386 = vsyncadd [#allocation5], %s385
          %s387 = smul.addr %s22, 16
          %s388 = scalar_lea.hbm %s3, %s387
          %s390 = sshll.u32 [#allocation4], 4
          %s391 = int_to_ptr.vmem [resolvable:$true] %s390
          %393 = dma.vmem_to_hbm [thread:$0]  %s391, 16, %s388, [#allocation5]
        $region40: #{tpu_custom_call.1} parent=27 // pred_fallthru
          _
        // Predicated region
        $region41: #{tpu_custom_call.1} parent=27 // pred_check
          %p394 = pneg %p105
        $region42: #{tpu_custom_call.1} parent=27 // pred_check_branch
          %396 = sbr.rel (%p394) target = $region44
        $region43: #{tpu_custom_call.1} parent=27 // pred_region
          %397 = dma.done [#allocation3], 16
        $region44: #{tpu_custom_call.1} parent=27 // pred_fallthru
          _
        // Predicated region
        $region45: #{tpu_custom_call.1} parent=27 // pred_check
          %p398 = pneg %p131
        $region46: #{tpu_custom_call.1} parent=27 // pred_check_branch
          %400 = sbr.rel (%p398) target = $region48
        $region47: #{tpu_custom_call.1} parent=27 // pred_region
          %401 = dma.done [#allocation5], 16
        $region48: #{tpu_custom_call.1} parent=27 // pred_fallthru
          _
      $region28: #{tpu_custom_call.1} parent=5 // pred_fallthru
        _
      %p402 = scmp.le.s32.totalorder 2, %s12
      // Predicated region
      $region49: #{tpu_custom_call.1} parent=5 // pred_check
        %p403 = pneg %p402
      $region50: #{tpu_custom_call.1} parent=5 // pred_check_branch
        %405 = sbr.rel (%p403) target = $region52
      $region51: #{tpu_custom_call.1} parent=5 // pred_region
        %s406 = ssub.s32 %s12, 2
      $region52: #{tpu_custom_call.1} parent=5 // pred_fallthru
        _
    $region6: #{tpu_custom_call.1} parent=1 // loop_footer
      %s16 = sadd.s32 1, %s12
    $region7: #{tpu_custom_call.1} parent=1 // loop_footer_branch
      %11 = sbr.rel target = $region3
    $region8: #{tpu_custom_call.1} parent=1 // loop_exit
      _
    %407 = vsyncpa [#allocation3], 1
    %s408 = scalar_lea.sflag [#allocation3], 1
    %409 = vsyncpa %s408, 1
    %410 = vsyncpa [#allocation5], 1

</llo_original>
